<compile_context>
chip_gen: v7x
topology: tpu7x:2x2x1
jax: 0.10.0
libtpu: 0.0.40
codegen_flags: <defaults>
</compile_context>

<pallas_src>
import functools
import math

import jax
import jax.numpy as jnp
from jax import lax
from jax.experimental import pallas as pl
from jax.experimental.pallas import tpu as pltpu


def _round_up(x, m):
    return ((x + m - 1) // m) * m


# ---------------------------------------------------------------------------
# Kernel
# ---------------------------------------------------------------------------
def _basic_block_kernel(x_ref, w1_ref, w2_ref, b1_ref, b2_ref, o_ref, *, img_rows):
    """Fused conv1->BN1->ReLU->conv2->BN2->(+x)->ReLU on NB stacked images.

    x_ref : (NB*H, W*Cpad) f32  NB images stacked on the sublane axis (also residual)
    w*_ref: (3, W*Cpad, W*Cpad) bf16  prepacked, BN-scale-folded conv weights
    b*_ref: (1, W*Cpad) f32     folded BatchNorm bias (zero in padded lanes)
    o_ref : (NB*H, W*Cpad) f32
    """
    rows = x_ref.shape[0]
    x2d = x_ref[...]                       # f32, kept for the residual add
    x_bf = x2d.astype(jnp.bfloat16)        # bf16 only for the MXU matmuls

    # Row-position masks: the +-1 sublane shifts implementing the height taps
    # must not leak rows across image boundaries when images are stacked.
    row_in_img = lax.broadcasted_iota(jnp.int32, (rows, 1), 0) % img_rows
    not_first = row_in_img != 0
    not_last = row_in_img != img_rows - 1

    def conv3x3_rows(a_bf16, w_ref):
        # Width taps + width zero-padding are baked into the packed weights, so
        # each filter row is ONE lane-dense MXU matmul; the height taps become
        # XLU sublane rotations (pltpu.roll) masked at image-boundary rows.
        z_top = jnp.dot(a_bf16, w_ref[0], preferred_element_type=jnp.float32)
        z_mid = jnp.dot(a_bf16, w_ref[1], preferred_element_type=jnp.float32)
        z_bot = jnp.dot(a_bf16, w_ref[2], preferred_element_type=jnp.float32)
        from_above = jnp.where(not_first, pltpu.roll(z_top, shift=1, axis=0), 0.0)
        from_below = jnp.where(not_last, pltpu.roll(z_bot, shift=rows - 1, axis=0), 0.0)
        return from_above + z_mid + from_below

    # conv1 (BN1 scale folded into weights) -> +bias -> ReLU; stays in VMEM/vregs
    out1 = jnp.maximum(conv3x3_rows(x_bf, w1_ref) + b1_ref[...], 0.0)
    # conv2 (BN2 scale folded) -> +bias -> +residual -> ReLU
    y = conv3x3_rows(out1.astype(jnp.bfloat16), w2_ref) + b2_ref[...] + x2d
    o_ref[...] = jnp.maximum(y, 0.0).astype(o_ref.dtype)


# ---------------------------------------------------------------------------
# Host-side packing
# ---------------------------------------------------------------------------
def _pack_conv3x3_rows(w_hwio, W):
    """Pack HWIO (3,3,Cin,Cout) weights into 3 (W*Cin, W*Cout) banded matrices.

    big[kh][wi*Cin + ci, w*Cout + co] = w[kh, wi - w + 1, ci, co]  if |wi-w| <= 1
                                        else 0
    i.e. the width taps and the width zero-padding of a stride-1 'SAME' conv
    are folded into a banded block matrix, so a whole filter row is a single
    lane-dense matmul on the (W*C)-folded layout.
    """
    KH, KW, _, _ = w_hwio.shape
    rows = []
    for kh in range(KH):
        m = None
        for kw in range(KW):
            shift = jnp.eye(W, W, k=1 - kw, dtype=jnp.float32)
            term = jnp.kron(shift, w_hwio[kh, kw].astype(jnp.float32))
            m = term if m is None else m + term
        rows.append(m)
    return jnp.stack(rows, axis=0)


def _fold_bn(gamma, beta, mean, var, eps=1e-5):
    scale = gamma / jnp.sqrt(var + eps)
    return scale, beta - mean * scale


def _pad_axis(a, axis, new_size):
    pad = [(0, 0)] * a.ndim
    pad[axis] = (0, new_size - a.shape[axis])
    return jnp.pad(a, pad)


def pack_basic_block_params(params, W):
    """One-time host precompute: pad channels so W*Cpad is a multiple of 128,
    fold the BN scales into the conv weights (inference mode), and build the
    banded per-filter-row weight matrices."""
    w1, w2 = params["w1"], params["w2"]
    cin, cmid, cout = w1.shape[2], w1.shape[3], w2.shape[3]
    assert cin == cout, "identity residual requires inplanes == planes"
    assert cmid == cout

    unit = 128 // math.gcd(W, 128)               # pad C so W*Cpad % 128 == 0
    cpad = _round_up(max(cin, cout), unit)

    s1, b1 = _fold_bn(**params["bn1"])
    s2, b2 = _fold_bn(**params["bn2"])

    w1p = _pad_axis(_pad_axis(w1.astype(jnp.float32), 2, cpad), 3, cpad)
    w2p = _pad_axis(_pad_axis(w2.astype(jnp.float32), 2, cpad), 3, cpad)
    s1p, b1p = _pad_axis(s1, 0, cpad), _pad_axis(b1, 0, cpad)
    s2p, b2p = _pad_axis(s2, 0, cpad), _pad_axis(b2, 0, cpad)

    # conv(x, w) * s == conv(x, w * s): fold BN scale into the Cout columns.
    w1s = w1p * s1p[None, None, None, :]
    w2s = w2p * s2p[None, None, None, :]

    return dict(
        cin=cin, cout=cout, cpad=cpad, W=W,
        w1=_pack_conv3x3_rows(w1s, W).astype(jnp.bfloat16),
        w2=_pack_conv3x3_rows(w2s, W).astype(jnp.bfloat16),
        b1=jnp.tile(b1p, W)[None, :].astype(jnp.float32),
        b2=jnp.tile(b2p, W)[None, :].astype(jnp.float32),
    )


# ---------------------------------------------------------------------------
# Forward (folded-layout entry point + NCHW wrapper)
# ---------------------------------------------------------------------------
def basic_block_forward_folded(x_folded, packed, H, *, images_per_step=None):
    """BasicBlock forward on the folded layout. x_folded: (B, H, W*Cpad) f32."""
    B, _, WC = x_folded.shape
    assert WC % 128 == 0, "folded lane width must be lane-dense (multiple of 128)"

    if images_per_step is None:
        # Stack images on the sublane axis to raise matmul M and amortize the
        # per-step pipeline overhead while keeping per-step tiles modest.
        images_per_step = 1
        for nb in range(1, B + 1):
            if B % nb == 0 and nb * H <= 512:
                images_per_step = nb
    assert B % images_per_step == 0
    rows_per_step = images_per_step * H
    num_steps = B // images_per_step

    x2 = x_folded.reshape(B * H, WC)

    # VMEM budget from actual tile bytes (double-buffered in/out tiles, resident
    # weights/biases) plus headroom for in-kernel temporaries.
    tile_bytes = rows_per_step * WC * 4
    w_bytes = 2 * 3 * WC * WC * 2
    b_bytes = 2 * WC * 4
    vmem_limit = min(3 * (4 * tile_bytes + 2 * (w_bytes + b_bytes)) + (4 << 20),
                     64 << 20)

    kernel = functools.partial(_basic_block_kernel, img_rows=H)

    # TODO(synk): at HRNet-scale W*C mark the grid-invariant operands below with
    # pipeline_mode=pl.Buffered(1) (or stage them once into scratch) to avoid a
    # useless second pipeline buffer, and add an H-row halo grid axis so v7x's
    # two TensorCores each get several pipelined steps.
    out2 = pl.pallas_call(
        kernel,
        out_shape=jax.ShapeDtypeStruct((B * H, WC), jnp.float32),
        grid=(num_steps,),
        in_specs=[
            pl.BlockSpec((rows_per_step, WC), lambda g: (g, 0)),   # x (+ residual)
            pl.BlockSpec((3, WC, WC), lambda g: (0, 0, 0)),        # w1 (scale-folded)
            pl.BlockSpec((3, WC, WC), lambda g: (0, 0, 0)),        # w2 (scale-folded)
            pl.BlockSpec((1, WC), lambda g: (0, 0)),               # bn1 bias
            pl.BlockSpec((1, WC), lambda g: (0, 0)),               # bn2 bias
        ],
        out_specs=pl.BlockSpec((rows_per_step, WC), lambda g: (g, 0)),
        compiler_params=pltpu.CompilerParams(
            dimension_semantics=("parallel",),
            vmem_limit_bytes=vmem_limit,
        ),
    )(x2, packed["w1"], packed["w2"], packed["b1"], packed["b2"])

    return out2.reshape(B, H, WC)


def basic_block_forward(x_nchw, params):
    """NCHW in/out wrapper matching the PyTorch module.

    For chained BasicBlocks keep activations in the folded (B, H, W*Cpad)
    layout and call basic_block_forward_folded directly: the NCHW<->folded
    transposes below are full HBM round trips and should run once per network,
    not once per block.
    """
    B, C, H, W = x_nchw.shape
    packed = pack_basic_block_params(params, W)
    cpad = packed["cpad"]

    x = jnp.transpose(x_nchw, (0, 2, 3, 1)).astype(jnp.float32)   # -> NHWC
    x = _pad_axis(x, 3, cpad)                                     # lane-dense channel pad
    x_folded = x.reshape(B, H, W * cpad)

    out_folded = basic_block_forward_folded(x_folded, packed, H)

    out = out_folded.reshape(B, H, W, cpad)[..., :packed["cout"]]
    return jnp.transpose(out, (0, 3, 1, 2))                       # -> NCHW


# ---------------------------------------------------------------------------
# Params + reference
# ---------------------------------------------------------------------------
def init_basic_block_params(key, inplanes, planes):
    """Deterministic synthetic params. Conv weights stored HWIO (3,3,Cin,Cout)."""
    ks = jax.random.split(key, 8)
    w1 = jax.random.normal(ks[0], (3, 3, inplanes, planes), jnp.float32) * 0.1
    w2 = jax.random.normal(ks[1], (3, 3, planes, planes), jnp.float32) * 0.1
    bn1 = dict(
        gamma=1.0 + 0.1 * jax.random.normal(ks[2], (planes,), jnp.float32),
        beta=0.1 * jax.random.normal(ks[3], (planes,), jnp.float32),
        mean=0.1 * jax.random.normal(ks[4], (planes,), jnp.float32),
        var=jnp.abs(jax.random.normal(ks[5], (planes,), jnp.float32)) + 0.5,
    )
    bn2 = dict(
        gamma=1.0 + 0.1 * jax.random.normal(ks[6], (planes,), jnp.float32),
        beta=0.1 * jax.random.normal(ks[7], (planes,), jnp.float32),
        mean=jnp.zeros((planes,), jnp.float32),
        var=jnp.ones((planes,), jnp.float32),
    )
    return dict(w1=w1, w2=w2, bn1=bn1, bn2=bn2)


def _reference_forward(x_nchw, params):
    """Pure-JAX reference (lax.conv, bf16 matmul inputs, f32 accumulation, BN
    applied post-conv as in the original module)."""
    x = jnp.transpose(x_nchw, (0, 2, 3, 1)).astype(jnp.float32)

    def conv(inp, w_hwio):
        return lax.conv_general_dilated(
            inp.astype(jnp.bfloat16), w_hwio.astype(jnp.bfloat16),
            window_strides=(1, 1), padding="SAME",
            dimension_numbers=("NHWC", "HWIO", "NHWC"),
            preferred_element_type=jnp.float32)

    s1, b1 = _fold_bn(**params["bn1"])
    s2, b2 = _fold_bn(**params["bn2"])
    out = jnp.maximum(conv(x, params["w1"]) * s1 + b1, 0.0)
    out = conv(out, params["w2"]) * s2 + b2 + x
    out = jnp.maximum(out, 0.0)
    return jnp.transpose(out, (0, 3, 1, 2))


if __name__ == "__main__":
    key = jax.random.PRNGKey(0)
    k_x, k_p = jax.random.split(key)

    B, C, H, W = 2, 4, 16, 16          # inplanes = planes = 4, stride = 1
    x = jax.random.normal(k_x, (B, C, H, W), jnp.float32)
    params = init_basic_block_params(k_p, inplanes=C, planes=C)

    out = jax.block_until_ready(basic_block_forward(x, params))
    ref = _reference_forward(x, params)

    assert out.shape == (B, C, H, W), out.shape
    max_err = float(jnp.max(jnp.abs(out - ref)))
    # Slightly looser than before: BN scales are folded into bf16 weights
    # (one extra bf16 rounding of w*s vs. the reference's round(w)*s).
    assert jnp.allclose(out, ref, atol=3e-2, rtol=3e-2), max_err

    print("KERNEL_OK")
</pallas_src>

<mosaic_0001>
module attributes {stable_mosaic.version = 11 : i64} {
  func.func @_basic_block_kernel(%arg0: i32, %arg1: memref<32x128xf32, #tpu.memory_space<vmem>>, %arg2: memref<3x128x128xbf16, #tpu.memory_space<vmem>>, %arg3: memref<3x128x128xbf16, #tpu.memory_space<vmem>>, %arg4: memref<1x128xf32, #tpu.memory_space<vmem>>, %arg5: memref<1x128xf32, #tpu.memory_space<vmem>>, %arg6: memref<32x128xf32, #tpu.memory_space<vmem>>) attributes {dimension_semantics = [#tpu.dimension_semantics<parallel>], iteration_bounds = array<i64: 1>, scalar_prefetch = 0 : i64, scratch_operands = 0 : i64, tpu.core_type = #tpu.core_type<tc>, window_params = [{transform_indices = @transform_0, window_bounds = array<i64: 32, 128>}, {pipeline_mode = #tpu.pipeline_mode<synchronous>, transform_indices = @transform_1, window_bounds = array<i64: 3, 128, 128>}, {pipeline_mode = #tpu.pipeline_mode<synchronous>, transform_indices = @transform_2, window_bounds = array<i64: 3, 128, 128>}, {pipeline_mode = #tpu.pipeline_mode<synchronous>, transform_indices = @transform_3, window_bounds = array<i64: 1, 128>}, {pipeline_mode = #tpu.pipeline_mode<synchronous>, transform_indices = @transform_4, window_bounds = array<i64: 1, 128>}, {transform_indices = @transform_5, window_bounds = array<i64: 32, 128>}]} {
    %c0 = arith.constant 0 : index
    %c0_0 = arith.constant 0 : index
    %0 = vector.load %arg1[%c0, %c0_0] : memref<32x128xf32, #tpu.memory_space<vmem>>, vector<32x128xf32>
    %1 = arith.truncf %0 : vector<32x128xf32> to vector<32x128xbf16>
    %2 = tpu.iota {dimensions = array<i32: 0>} : vector<32x1xi32>
    %c16_i32 = arith.constant 16 : i32
    %c0_i32 = arith.constant 0 : i32
    %3 = arith.cmpi eq, %c16_i32, %c0_i32 : i32
    %c1_i32 = arith.constant 1 : i32
    %4 = arith.select %3, %c1_i32, %c16_i32 : i32
    %5 = vector.broadcast %4 : i32 to vector<32x1xi32>
    %6 = arith.remsi %2, %5 : vector<32x1xi32>
    %c0_i32_1 = arith.constant 0 : i32
    %7 = vector.broadcast %c0_i32_1 : i32 to vector<32x1xi32>
    %8 = arith.cmpi ne, %6, %7 : vector<32x1xi32>
    %c0_i32_2 = arith.constant 0 : i32
    %9 = vector.broadcast %c0_i32_2 : i32 to vector<32x1xi32>
    %10 = arith.cmpi slt, %6, %9 : vector<32x1xi32>
    %c0_i32_3 = arith.constant 0 : i32
    %11 = arith.cmpi slt, %4, %c0_i32_3 : i32
    %12 = vector.broadcast %11 : i1 to vector<32x1xi1>
    %13 = vector.broadcast %12 : vector<32x1xi1> to vector<32x1xi1>
    %14 = arith.xori %10, %13 : vector<32x1xi1>
    %15 = arith.andi %14, %8 : vector<32x1xi1>
    %16 = vector.broadcast %4 : i32 to vector<32x1xi32>
    %17 = arith.addi %6, %16 : vector<32x1xi32>
    %18 = arith.select %15, %17, %6 : vector<32x1xi1>, vector<32x1xi32>
    %c0_i32_4 = arith.constant 0 : i32
    %19 = vector.broadcast %c0_i32_4 : i32 to vector<32x1xi32>
    %20 = arith.cmpi ne, %18, %19 : vector<32x1xi32>
    %c15_i32 = arith.constant 15 : i32
    %21 = vector.broadcast %c15_i32 : i32 to vector<32x1xi32>
    %22 = arith.cmpi ne, %18, %21 : vector<32x1xi32>
    %c0_5 = arith.constant 0 : index
    %c0_6 = arith.constant 0 : index
    %c0_7 = arith.constant 0 : index
    %23 = vector.load %arg2[%c0_5, %c0_6, %c0_7] : memref<3x128x128xbf16, #tpu.memory_space<vmem>>, vector<1x128x128xbf16>
    %24 = vector.shape_cast %23 : vector<1x128x128xbf16> to vector<128x128xbf16>
    %cst = arith.constant dense<0.000000e+00> : vector<32x128xf32>
    %25 = tpu.matmul %1, %24, %cst {dimension_numbers = #tpu.dot_dimension_numbers<[1], [0], [0], [1], [0, 0, 1, 1], [], []>} : vector<32x128xbf16>, vector<128x128xbf16>, vector<32x128xf32> -> vector<32x128xf32>
    %c1 = arith.constant 1 : index
    %c0_8 = arith.constant 0 : index
    %c0_9 = arith.constant 0 : index
    %26 = vector.load %arg2[%c1, %c0_8, %c0_9] : memref<3x128x128xbf16, #tpu.memory_space<vmem>>, vector<1x128x128xbf16>
    %27 = vector.shape_cast %26 : vector<1x128x128xbf16> to vector<128x128xbf16>
    %cst_10 = arith.constant dense<0.000000e+00> : vector<32x128xf32>
    %28 = tpu.matmul %1, %27, %cst_10 {dimension_numbers = #tpu.dot_dimension_numbers<[1], [0], [0], [1], [0, 0, 1, 1], [], []>} : vector<32x128xbf16>, vector<128x128xbf16>, vector<32x128xf32> -> vector<32x128xf32>
    %c2 = arith.constant 2 : index
    %c0_11 = arith.constant 0 : index
    %c0_12 = arith.constant 0 : index
    %29 = vector.load %arg2[%c2, %c0_11, %c0_12] : memref<3x128x128xbf16, #tpu.memory_space<vmem>>, vector<1x128x128xbf16>
    %30 = vector.shape_cast %29 : vector<1x128x128xbf16> to vector<128x128xbf16>
    %cst_13 = arith.constant dense<0.000000e+00> : vector<32x128xf32>
    %31 = tpu.matmul %1, %30, %cst_13 {dimension_numbers = #tpu.dot_dimension_numbers<[1], [0], [0], [1], [0, 0, 1, 1], [], []>} : vector<32x128xbf16>, vector<128x128xbf16>, vector<32x128xf32> -> vector<32x128xf32>
    %c1_i32_14 = arith.constant 1 : i32
    %32 = tpu.dynamic_rotate %25 by %c1_i32_14 dim 0 : vector<32x128xf32>, i32 -> vector<32x128xf32>
    %cst_15 = arith.constant 0.000000e+00 : f32
    %33 = vector.shape_cast %20 : vector<32x1xi1> to vector<32x1xi1>
    %34 = vector.broadcast %33 : vector<32x1xi1> to vector<32x128xi1>
    %35 = vector.broadcast %cst_15 : f32 to vector<32x128xf32>
    %36 = arith.select %34, %32, %35 : vector<32x128xi1>, vector<32x128xf32>
    %c31_i32 = arith.constant 31 : i32
    %37 = tpu.dynamic_rotate %31 by %c31_i32 dim 0 : vector<32x128xf32>, i32 -> vector<32x128xf32>
    %cst_16 = arith.constant 0.000000e+00 : f32
    %38 = vector.shape_cast %22 : vector<32x1xi1> to vector<32x1xi1>
    %39 = vector.broadcast %38 : vector<32x1xi1> to vector<32x128xi1>
    %40 = vector.broadcast %cst_16 : f32 to vector<32x128xf32>
    %41 = arith.select %39, %37, %40 : vector<32x128xi1>, vector<32x128xf32>
    %42 = arith.addf %36, %28 : vector<32x128xf32>
    %43 = arith.addf %42, %41 : vector<32x128xf32>
    %c0_17 = arith.constant 0 : index
    %c0_18 = arith.constant 0 : index
    %44 = vector.load %arg4[%c0_17, %c0_18] : memref<1x128xf32, #tpu.memory_space<vmem>>, vector<1x128xf32>
    %45 = vector.broadcast %44 : vector<1x128xf32> to vector<32x128xf32>
    %46 = arith.addf %43, %45 : vector<32x128xf32>
    %cst_19 = arith.constant 0.000000e+00 : f32
    %47 = vector.broadcast %cst_19 : f32 to vector<32x128xf32>
    %48 = arith.maximumf %46, %47 : vector<32x128xf32>
    %49 = arith.truncf %48 : vector<32x128xf32> to vector<32x128xbf16>
    %c0_20 = arith.constant 0 : index
    %c0_21 = arith.constant 0 : index
    %c0_22 = arith.constant 0 : index
    %50 = vector.load %arg3[%c0_20, %c0_21, %c0_22] : memref<3x128x128xbf16, #tpu.memory_space<vmem>>, vector<1x128x128xbf16>
    %51 = vector.shape_cast %50 : vector<1x128x128xbf16> to vector<128x128xbf16>
    %cst_23 = arith.constant dense<0.000000e+00> : vector<32x128xf32>
    %52 = tpu.matmul %49, %51, %cst_23 {dimension_numbers = #tpu.dot_dimension_numbers<[1], [0], [0], [1], [0, 0, 1, 1], [], []>} : vector<32x128xbf16>, vector<128x128xbf16>, vector<32x128xf32> -> vector<32x128xf32>
    %c1_24 = arith.constant 1 : index
    %c0_25 = arith.constant 0 : index
    %c0_26 = arith.constant 0 : index
    %53 = vector.load %arg3[%c1_24, %c0_25, %c0_26] : memref<3x128x128xbf16, #tpu.memory_space<vmem>>, vector<1x128x128xbf16>
    %54 = vector.shape_cast %53 : vector<1x128x128xbf16> to vector<128x128xbf16>
    %cst_27 = arith.constant dense<0.000000e+00> : vector<32x128xf32>
    %55 = tpu.matmul %49, %54, %cst_27 {dimension_numbers = #tpu.dot_dimension_numbers<[1], [0], [0], [1], [0, 0, 1, 1], [], []>} : vector<32x128xbf16>, vector<128x128xbf16>, vector<32x128xf32> -> vector<32x128xf32>
    %c2_28 = arith.constant 2 : index
    %c0_29 = arith.constant 0 : index
    %c0_30 = arith.constant 0 : index
    %56 = vector.load %arg3[%c2_28, %c0_29, %c0_30] : memref<3x128x128xbf16, #tpu.memory_space<vmem>>, vector<1x128x128xbf16>
    %57 = vector.shape_cast %56 : vector<1x128x128xbf16> to vector<128x128xbf16>
    %cst_31 = arith.constant dense<0.000000e+00> : vector<32x128xf32>
    %58 = tpu.matmul %49, %57, %cst_31 {dimension_numbers = #tpu.dot_dimension_numbers<[1], [0], [0], [1], [0, 0, 1, 1], [], []>} : vector<32x128xbf16>, vector<128x128xbf16>, vector<32x128xf32> -> vector<32x128xf32>
    %c1_i32_32 = arith.constant 1 : i32
    %59 = tpu.dynamic_rotate %52 by %c1_i32_32 dim 0 : vector<32x128xf32>, i32 -> vector<32x128xf32>
    %cst_33 = arith.constant 0.000000e+00 : f32
    %60 = vector.shape_cast %20 : vector<32x1xi1> to vector<32x1xi1>
    %61 = vector.broadcast %60 : vector<32x1xi1> to vector<32x128xi1>
    %62 = vector.broadcast %cst_33 : f32 to vector<32x128xf32>
    %63 = arith.select %61, %59, %62 : vector<32x128xi1>, vector<32x128xf32>
    %c31_i32_34 = arith.constant 31 : i32
    %64 = tpu.dynamic_rotate %58 by %c31_i32_34 dim 0 : vector<32x128xf32>, i32 -> vector<32x128xf32>
    %cst_35 = arith.constant 0.000000e+00 : f32
    %65 = vector.shape_cast %22 : vector<32x1xi1> to vector<32x1xi1>
    %66 = vector.broadcast %65 : vector<32x1xi1> to vector<32x128xi1>
    %67 = vector.broadcast %cst_35 : f32 to vector<32x128xf32>
    %68 = arith.select %66, %64, %67 : vector<32x128xi1>, vector<32x128xf32>
    %69 = arith.addf %63, %55 : vector<32x128xf32>
    %70 = arith.addf %69, %68 : vector<32x128xf32>
    %c0_36 = arith.constant 0 : index
    %c0_37 = arith.constant 0 : index
    %71 = vector.load %arg5[%c0_36, %c0_37] : memref<1x128xf32, #tpu.memory_space<vmem>>, vector<1x128xf32>
    %72 = vector.broadcast %71 : vector<1x128xf32> to vector<32x128xf32>
    %73 = arith.addf %70, %72 : vector<32x128xf32>
    %74 = arith.addf %73, %0 : vector<32x128xf32>
    %cst_38 = arith.constant 0.000000e+00 : f32
    %75 = vector.broadcast %cst_38 : f32 to vector<32x128xf32>
    %76 = arith.maximumf %74, %75 : vector<32x128xf32>
    %c0_39 = arith.constant 0 : index
    %c0_40 = arith.constant 0 : index
    %77 = vector.load %arg6[%c0_39, %c0_40] : memref<32x128xf32, #tpu.memory_space<vmem>>, vector<32x128xf32>
    tpu.vector_store %arg6[%c0_39, %c0_40], %76 {strides = array<i32>} : memref<32x128xf32, #tpu.memory_space<vmem>>, vector<32x128xf32>,
    return
  }
  func.func @transform_0(%arg0: i32) -> (i32, i32) {
    %c0_i32 = arith.constant 0 : i32
    %c0_i32_0 = arith.constant 0 : i32
    return %arg0, %c0_i32 : i32, i32
  }
  func.func @transform_1(%arg0: i32) -> (i32, i32, i32) {
    %c0_i32 = arith.constant 0 : i32
    %c0_i32_0 = arith.constant 0 : i32
    %c0_i32_1 = arith.constant 0 : i32
    %c0_i32_2 = arith.constant 0 : i32
    return %c0_i32, %c0_i32_0, %c0_i32_1 : i32, i32, i32
  }
  func.func @transform_2(%arg0: i32) -> (i32, i32, i32) {
    %c0_i32 = arith.constant 0 : i32
    %c0_i32_0 = arith.constant 0 : i32
    %c0_i32_1 = arith.constant 0 : i32
    %c0_i32_2 = arith.constant 0 : i32
    return %c0_i32, %c0_i32_0, %c0_i32_1 : i32, i32, i32
  }
  func.func @transform_3(%arg0: i32) -> (i32, i32) {
    %c0_i32 = arith.constant 0 : i32
    %c0_i32_0 = arith.constant 0 : i32
    %c0_i32_1 = arith.constant 0 : i32
    return %c0_i32, %c0_i32_0 : i32, i32
  }
  func.func @transform_4(%arg0: i32) -> (i32, i32) {
    %c0_i32 = arith.constant 0 : i32
    %c0_i32_0 = arith.constant 0 : i32
    %c0_i32_1 = arith.constant 0 : i32
    return %c0_i32, %c0_i32_0 : i32, i32
  }
  func.func @transform_5(%arg0: i32) -> (i32, i32) {
    %c0_i32 = arith.constant 0 : i32
    %c0_i32_0 = arith.constant 0 : i32
    return %arg0, %c0_i32 : i32, i32
  }
}

</mosaic_0001>

<llo_original>
// kernel: tpu_custom_call.1
$region0: #{tpu_custom_call.1}
  #allocation0 [shape = 'u32[]', space=smem, size = 0x4, offset = 0x4, fixed_abs, tag = 'smem constant byte address 0x4 - core index']
  #allocation1 [shape = 'u32[144,128]{1,0:T(1,128)}', space=vmem, size = 0x12000, scoped, tag = 'internal scratch']
  %s0 = inlined_call_operand.hbm [shape: f32[32,128], index: 0, kind: input, shape index: {}]
  %s1 = inlined_call_operand.hbm [shape: bf16[3,128,128], index: 1, kind: input, shape index: {}]
  %s2 = inlined_call_operand.hbm [shape: bf16[3,128,128], index: 2, kind: input, shape index: {}]
  %s3 = inlined_call_operand.vmem [shape: f32[1,128], index: 3, kind: input, shape index: {}]
  %s4 = inlined_call_operand.vmem [shape: f32[1,128], index: 4, kind: input, shape index: {}]
  %s5 = inlined_call_operand.hbm [shape: f32[32,128], index: 5, kind: output, shape index: {}]
  %s6 = sld [smem:[#allocation0]]
  $region42: #{tpu_custom_call.1} parent=0
    _
  %s8 = ssub.s32 1, %s6
  %s9 = scalar_select 0, %s8, %s6
  $region1: #{tpu_custom_call.1} parent=0
    #allocation2 [shape = 'u8[16384]{0}', space=vmem, size = 0x4000, scoped, tag = 'input window, operand 0, single buffered']
    #allocation3 [shape = 's32[1]{0}', space=sflag, size = 0x4, scoped, tag = 'scoped memory for tpu_custom_call.1']
    #allocation4 [shape = 's32[1]{0}', space=sflag, size = 0x4, scoped, tag = 'scoped memory for tpu_custom_call.1']
    #allocation5 [shape = 'u8[98304]{0}', space=vmem, size = 0x18000, scoped, tag = 'input window, operand 1, single buffered']
    #allocation6 [shape = 's32[1]{0}', space=sflag, size = 0x4, scoped, tag = 'scoped memory for tpu_custom_call.1']
    #allocation7 [shape = 'u8[98304]{0}', space=vmem, size = 0x18000, scoped, tag = 'input window, operand 2, single buffered']
    #allocation8 [shape = 'u8[16384]{0}', space=vmem, size = 0x4000, scoped, tag = 'output window, operand 0, single buffered']
    %10 = vsyncpa [#allocation3], 0
    %11 = vsyncpa [#allocation6], 0
    %12 = vsyncpa [#allocation4], 0
    // Predicated region
    $region2: #{tpu_custom_call.1} parent=1 // pred_check
      _
    $region3: #{tpu_custom_call.1} parent=1 // pred_check_branch
      %14 = sbr.rel (0) target = $region5
    $region4: #{tpu_custom_call.1} parent=1 // pred_region
      %s16 = ssub.s32 512, 512
      %17 = vsyncadd [#allocation3], %s16
      %s18 = sshll.u32 [#allocation2], 4
      %s19 = int_to_ptr.vmem [resolvable:$true] %s18
      %24 = dma.hbm_to_vmem [thread:$0]  %s0, 512, %s19, [#allocation3], 128, 128, 8
    $region5: #{tpu_custom_call.1} parent=1 // pred_fallthru
      _
    // Predicated region
    $region6: #{tpu_custom_call.1} parent=1 // pred_check
      _
    $region7: #{tpu_custom_call.1} parent=1 // pred_check_branch
      %26 = sbr.rel (0) target = $region9
    $region8: #{tpu_custom_call.1} parent=1 // pred_region
      %s28 = ssub.s32 3072, 3072
      %29 = vsyncadd [#allocation6], %s28
      %s30 = sshll.u32 [#allocation5], 4
      %s31 = int_to_ptr.vmem [resolvable:$true] %s30
      %36 = dma.hbm_to_vmem [thread:$0]  %s1, 3072, %s31, [#allocation6], 64, 64, 4
    $region9: #{tpu_custom_call.1} parent=1 // pred_fallthru
      _
    // Predicated region
    $region10: #{tpu_custom_call.1} parent=1 // pred_check
      _
    $region11: #{tpu_custom_call.1} parent=1 // pred_check_branch
      %38 = sbr.rel (0) target = $region13
    $region12: #{tpu_custom_call.1} parent=1 // pred_region
      %s40 = ssub.s32 3072, 3072
      %41 = vsyncadd [#allocation6], %s40
      %s42 = sshll.u32 [#allocation7], 4
      %s43 = int_to_ptr.vmem [resolvable:$true] %s42
      %48 = dma.hbm_to_vmem [thread:$0]  %s2, 3072, %s43, [#allocation6], 64, 64, 4
    $region13: #{tpu_custom_call.1} parent=1 // pred_fallthru
      _
    // Predicated region
    $region14: #{tpu_custom_call.1} parent=1 // pred_check
      _
    $region15: #{tpu_custom_call.1} parent=1 // pred_check_branch
      %50 = sbr.rel (0) target = $region17
    $region16: #{tpu_custom_call.1} parent=1 // pred_region
      _
    $region17: #{tpu_custom_call.1} parent=1 // pred_fallthru
      _
    // Predicated region
    $region18: #{tpu_custom_call.1} parent=1 // pred_check
      _
    $region19: #{tpu_custom_call.1} parent=1 // pred_check_branch
      %52 = sbr.rel (0) target = $region21
    $region20: #{tpu_custom_call.1} parent=1 // pred_region
      _
    $region21: #{tpu_custom_call.1} parent=1 // pred_fallthru
      _
    // Predicated region
    $region22: #{tpu_custom_call.1} parent=1 // pred_check
      _
    $region23: #{tpu_custom_call.1} parent=1 // pred_check_branch
      %54 = sbr.rel (0) target = $region25
    $region24: #{tpu_custom_call.1} parent=1 // pred_region
      %55 = dma.done [#allocation3], 512
    $region25: #{tpu_custom_call.1} parent=1 // pred_fallthru
      _
    // Predicated region
    $region26: #{tpu_custom_call.1} parent=1 // pred_check
      _
    $region27: #{tpu_custom_call.1} parent=1 // pred_check_branch
      %57 = sbr.rel (0) target = $region29
    $region28: #{tpu_custom_call.1} parent=1 // pred_region
      %58 = dma.done [#allocation6], 3072
    $region29: #{tpu_custom_call.1} parent=1 // pred_fallthru
      _
    // Predicated region
    $region30: #{tpu_custom_call.1} parent=1 // pred_check
      _
    $region31: #{tpu_custom_call.1} parent=1 // pred_check_branch
      %60 = sbr.rel (0) target = $region33
    $region32: #{tpu_custom_call.1} parent=1 // pred_region
      %61 = dma.done [#allocation6], 3072
    $region33: #{tpu_custom_call.1} parent=1 // pred_fallthru
      _
    %v63 = vld [vmem:[#allocation2] sm:$0xff]
    %v64 = vld [vmem:[#allocation2 + $0x8] sm:$0xff]
    %v65 = vld [vmem:[#allocation2 + $0x10] sm:$0xff]
    %v66 = vld [vmem:[#allocation2 + $0x18] sm:$0xff]
    %v67 = vpack.c.bf16 %v64, %v63
    %v68 = vpack.c.bf16 %v66, %v65
    %v69 = vlaneseq
    %v70 = vshrl.u32 %v69, 7
    %v71 = vadd.s32 %v70, 8
    %v72 = vadd.s32 %v70, 16
    %v73 = vadd.s32 %v70, 24
    %vm74 = vcmp.lt.s32.totalorder %v70, 0
    %v75 = vsub.s32 0, %v70
    %v76 = vsel %vm74, %v75, %v70
    %v77 = vshrl.u32 %v76, 4
    %v78 = vand.u32 %v76, 15
    %v79 = vsub.s32 0, %v78
    %v80 = vsel %vm74, %v79, %v78
    %vm81 = vcmp.lt.s32.totalorder %v71, 0
    %v82 = vsub.s32 0, %v71
    %v83 = vsel %vm81, %v82, %v71
    %v84 = vshrl.u32 %v83, 4
    %v85 = vand.u32 %v83, 15
    %v86 = vsub.s32 0, %v85
    %v87 = vsel %vm81, %v86, %v85
    %vm88 = vcmp.lt.s32.totalorder %v72, 0
    %v89 = vsub.s32 0, %v72
    %v90 = vsel %vm88, %v89, %v72
    %v91 = vshrl.u32 %v90, 4
    %v92 = vand.u32 %v90, 15
    %v93 = vsub.s32 0, %v92
    %v94 = vsel %vm88, %v93, %v92
    %vm95 = vcmp.lt.s32.totalorder %v73, 0
    %v96 = vsub.s32 0, %v73
    %v97 = vsel %vm95, %v96, %v73
    %v98 = vshrl.u32 %v97, 4
    %v99 = vand.u32 %v97, 15
    %v100 = vsub.s32 0, %v99
    %v101 = vsel %vm95, %v100, %v99
    %vm102 = vcmp.ne.s32.totalorder %v80, 0
    %vm103 = vcmp.ne.s32.totalorder %v87, 0
    %vm104 = vcmp.ne.s32.totalorder %v94, 0
    %vm105 = vcmp.ne.s32.totalorder %v101, 0
    %vm106 = vcmp.lt.s32.totalorder %v80, 0
    %vm107 = vcmp.lt.s32.totalorder %v87, 0
    %vm108 = vcmp.lt.s32.totalorder %v94, 0
    %vm109 = vcmp.lt.s32.totalorder %v101, 0
    %vm110 = vmand %vm106, %vm102
    %vm111 = vmand %vm107, %vm103
    %vm112 = vmand %vm108, %vm104
    %vm113 = vmand %vm109, %vm105
    %v114 = vadd.s32 %v80, 16
    %v115 = vadd.s32 %v87, 16
    %v116 = vadd.s32 %v94, 16
    %v117 = vadd.s32 %v101, 16
    %v118 = vsel %vm110, %v114, %v80
    %v119 = vsel %vm111, %v115, %v87
    %v120 = vsel %vm112, %v116, %v94
    %v121 = vsel %vm113, %v117, %v101
    %vm122 = vcmp.ne.s32.totalorder %v118, 0
    %vm123 = vcmp.ne.s32.totalorder %v119, 0
    %vm124 = vcmp.ne.s32.totalorder %v120, 0
    %vm125 = vcmp.ne.s32.totalorder %v121, 0
    %vm126 = vcmp.ne.s32.totalorder %v118, 15
    %vm127 = vcmp.ne.s32.totalorder %v119, 15
    %vm128 = vcmp.ne.s32.totalorder %v120, 15
    %vm129 = vcmp.ne.s32.totalorder %v121, 15
    %v130 = vld [vmem:[#allocation5] sm:$0xf]
    %v131 = vld [vmem:[#allocation5 + $0x4] sm:$0xf]
    %v132 = vld [vmem:[#allocation5 + $0x8] sm:$0xf]
    %v133 = vld [vmem:[#allocation5 + $0xc] sm:$0xf]
    %v134 = vld [vmem:[#allocation5 + $0x10] sm:$0xf]
    %v135 = vld [vmem:[#allocation5 + $0x14] sm:$0xf]
    %v136 = vld [vmem:[#allocation5 + $0x18] sm:$0xf]
    %v137 = vld [vmem:[#allocation5 + $0x1c] sm:$0xf]
    %v138 = vld [vmem:[#allocation5 + $0x20] sm:$0xf]
    %v139 = vld [vmem:[#allocation5 + $0x24] sm:$0xf]
    %v140 = vld [vmem:[#allocation5 + $0x28] sm:$0xf]
    %v141 = vld [vmem:[#allocation5 + $0x2c] sm:$0xf]
    %v142 = vld [vmem:[#allocation5 + $0x30] sm:$0xf]
    %v143 = vld [vmem:[#allocation5 + $0x34] sm:$0xf]
    %v144 = vld [vmem:[#allocation5 + $0x38] sm:$0xf]
    %v145 = vld [vmem:[#allocation5 + $0x3c] sm:$0xf]
    %v162 = vunpack.c.l.b16 %v130
    %v163 = vunpack.c.l.b16 %v131
    %v164 = vunpack.c.l.b16 %v132
    %v165 = vunpack.c.l.b16 %v133
    %v166 = vunpack.c.l.b16 %v134
    %v167 = vunpack.c.l.b16 %v135
    %v168 = vunpack.c.l.b16 %v136
    %v169 = vunpack.c.l.b16 %v137
    %v170 = vunpack.c.l.b16 %v138
    %v171 = vunpack.c.l.b16 %v139
    %v172 = vunpack.c.l.b16 %v140
    %v173 = vunpack.c.l.b16 %v141
    %v174 = vunpack.c.l.b16 %v142
    %v175 = vunpack.c.l.b16 %v143
    %v176 = vunpack.c.l.b16 %v144
    %v177 = vunpack.c.l.b16 %v145
    %v178 = vpack.c.b16 %v163, %v162
    %v179 = vpack.c.b16 %v165, %v164
    %v180 = vpack.c.b16 %v167, %v166
    %v181 = vpack.c.b16 %v169, %v168
    %v182 = vpack.c.b16 %v171, %v170
    %v183 = vpack.c.b16 %v173, %v172
    %v184 = vpack.c.b16 %v175, %v174
    %v185 = vpack.c.b16 %v177, %v176
    %194 = vmatprep.subr.bf16.mxu0 0
    %195 = vmatpush1.bf16.msra.mxu0 %v178
    %196 = vmatprep.subr.bf16.mxu0 0
    %197 = vmatpush1.bf16.msra.mxu0 %v179
    %198 = vmatprep.subr.bf16.mxu0 0
    %199 = vmatpush1.bf16.msra.mxu0 %v180
    %200 = vmatprep.subr.bf16.mxu0 0
    %201 = vmatpush1.bf16.msra.mxu0 %v181
    %202 = vmatprep.subr.bf16.mxu0 0
    %203 = vmatpush1.bf16.msra.mxu0 %v182
    %204 = vmatprep.subr.bf16.mxu0 0
    %205 = vmatpush1.bf16.msra.mxu0 %v183
    %206 = vmatprep.subr.bf16.mxu0 0
    %207 = vmatpush1.bf16.msra.mxu0 %v184
    %208 = vmatprep.subr.bf16.mxu0 0
    %209 = vmatpush1.bf16.msra.mxu0 %v185
    %210 = vmatprep.subr.bf16.mxu0 0
    %211 = vmatpush1.bf16.msra.mxu0 0
    %212 = vmatprep.subr.bf16.mxu0 0
    %213 = vmatpush1.bf16.msra.mxu0 0
    %214 = vmatprep.subr.bf16.mxu0 0
    %215 = vmatpush1.bf16.msra.mxu0 0
    %216 = vmatprep.subr.bf16.mxu0 0
    %217 = vmatpush1.bf16.msra.mxu0 0
    %218 = vmatprep.subr.bf16.mxu0 0
    %219 = vmatpush1.bf16.msra.mxu0 0
    %220 = vmatprep.subr.bf16.mxu0 0
    %221 = vmatpush1.bf16.msra.mxu0 0
    %222 = vmatprep.subr.bf16.mxu0 0
    %223 = vmatpush1.bf16.msra.mxu0 0
    %224 = vmatprep.subr.bf16.mxu0 0
    %225 = vmatpush1.bf16.msra.mxu0 0
    %226 = vmatprep.mubr.bf16.mxu0 0
    %227 = vmatmul.mubr.bf16.gmra.mrb[0].mxu0 %v67
    %v228 = vpop.f32.mrb[0].mxu0
    %v229 = vadd.f32 0.0, %v228
    %v230 = vpop.f32.mrb[0].mxu0
    %v231 = vpop.f32.mrb[0].mxu0
    %v232 = vadd.f32 0.0, %v231
    %v233 = vpop.f32.mrb[0].mxu0
    %234 = vmatprep.mubr.bf16.mxu0 0
    %235 = vmatmul.mubr.bf16.gmra.mrb[0].mxu0 %v68
    %v236 = vpop.f32.mrb[0].mxu0
    %v237 = vadd.f32 0.0, %v236
    %v238 = vpop.f32.mrb[0].mxu0
    %v239 = vpop.f32.mrb[0].mxu0
    %v240 = vadd.f32 0.0, %v239
    %v241 = vpop.f32.mrb[0].mxu0
    %242 = vdwg.mxu0
    %s243 = scalar_lea.vmem [#allocation5], 64
    %v244 = vld [vmem:[%s243] sm:$0xf]
    %v245 = vld [vmem:[%s243 + $0x4] sm:$0xf]
    %v246 = vld [vmem:[%s243 + $0x8] sm:$0xf]
    %v247 = vld [vmem:[%s243 + $0xc] sm:$0xf]
    %v248 = vld [vmem:[%s243 + $0x10] sm:$0xf]
    %v249 = vld [vmem:[%s243 + $0x14] sm:$0xf]
    %v250 = vld [vmem:[%s243 + $0x18] sm:$0xf]
    %v251 = vld [vmem:[%s243 + $0x1c] sm:$0xf]
    %v252 = vld [vmem:[%s243 + $0x20] sm:$0xf]
    %v253 = vld [vmem:[%s243 + $0x24] sm:$0xf]
    %v254 = vld [vmem:[%s243 + $0x28] sm:$0xf]
    %v255 = vld [vmem:[%s243 + $0x2c] sm:$0xf]
    %v256 = vld [vmem:[%s243 + $0x30] sm:$0xf]
    %v257 = vld [vmem:[%s243 + $0x34] sm:$0xf]
    %v258 = vld [vmem:[%s243 + $0x38] sm:$0xf]
    %v259 = vld [vmem:[%s243 + $0x3c] sm:$0xf]
    %v276 = vunpack.c.l.b16 %v244
    %v277 = vunpack.c.l.b16 %v245
    %v278 = vunpack.c.l.b16 %v246
    %v279 = vunpack.c.l.b16 %v247
    %v280 = vunpack.c.l.b16 %v248
    %v281 = vunpack.c.l.b16 %v249
    %v282 = vunpack.c.l.b16 %v250
    %v283 = vunpack.c.l.b16 %v251
    %v284 = vunpack.c.l.b16 %v252
    %v285 = vunpack.c.l.b16 %v253
    %v286 = vunpack.c.l.b16 %v254
    %v287 = vunpack.c.l.b16 %v255
    %v288 = vunpack.c.l.b16 %v256
    %v289 = vunpack.c.l.b16 %v257
    %v290 = vunpack.c.l.b16 %v258
    %v291 = vunpack.c.l.b16 %v259
    %v292 = vpack.c.b16 %v277, %v276
    %v293 = vpack.c.b16 %v279, %v278
    %v294 = vpack.c.b16 %v281, %v280
    %v295 = vpack.c.b16 %v283, %v282
    %v296 = vpack.c.b16 %v285, %v284
    %v297 = vpack.c.b16 %v287, %v286
    %v298 = vpack.c.b16 %v289, %v288
    %v299 = vpack.c.b16 %v291, %v290
    %308 = vmatprep.subr.bf16.mxu0 0
    %309 = vmatpush1.bf16.msra.mxu0 %v292
    %310 = vmatprep.subr.bf16.mxu0 0
    %311 = vmatpush1.bf16.msra.mxu0 %v293
    %312 = vmatprep.subr.bf16.mxu0 0
    %313 = vmatpush1.bf16.msra.mxu0 %v294
    %314 = vmatprep.subr.bf16.mxu0 0
    %315 = vmatpush1.bf16.msra.mxu0 %v295
    %316 = vmatprep.subr.bf16.mxu0 0
    %317 = vmatpush1.bf16.msra.mxu0 %v296
    %318 = vmatprep.subr.bf16.mxu0 0
    %319 = vmatpush1.bf16.msra.mxu0 %v297
    %320 = vmatprep.subr.bf16.mxu0 0
    %321 = vmatpush1.bf16.msra.mxu0 %v298
    %322 = vmatprep.subr.bf16.mxu0 0
    %323 = vmatpush1.bf16.msra.mxu0 %v299
    %324 = vmatprep.subr.bf16.mxu0 0
    %325 = vmatpush1.bf16.msra.mxu0 0
    %326 = vmatprep.subr.bf16.mxu0 0
    %327 = vmatpush1.bf16.msra.mxu0 0
    %328 = vmatprep.subr.bf16.mxu0 0
    %329 = vmatpush1.bf16.msra.mxu0 0
    %330 = vmatprep.subr.bf16.mxu0 0
    %331 = vmatpush1.bf16.msra.mxu0 0
    %332 = vmatprep.subr.bf16.mxu0 0
    %333 = vmatpush1.bf16.msra.mxu0 0
    %334 = vmatprep.subr.bf16.mxu0 0
    %335 = vmatpush1.bf16.msra.mxu0 0
    %336 = vmatprep.subr.bf16.mxu0 0
    %337 = vmatpush1.bf16.msra.mxu0 0
    %338 = vmatprep.subr.bf16.mxu0 0
    %339 = vmatpush1.bf16.msra.mxu0 0
    %340 = vmatprep.mubr.bf16.mxu0 0
    %341 = vmatmul.mubr.bf16.gmra.mrb[0].mxu0 %v67
    %v342 = vpop.f32.mrb[0].mxu0
    %v343 = vadd.f32 0.0, %v342
    %v344 = vpop.f32.mrb[0].mxu0
    %v345 = vpop.f32.mrb[0].mxu0
    %v346 = vadd.f32 0.0, %v345
    %v347 = vpop.f32.mrb[0].mxu0
    %348 = vmatprep.mubr.bf16.mxu0 0
    %349 = vmatmul.mubr.bf16.gmra.mrb[0].mxu0 %v68
    %v350 = vpop.f32.mrb[0].mxu0
    %v351 = vadd.f32 0.0, %v350
    %v352 = vpop.f32.mrb[0].mxu0
    %v353 = vpop.f32.mrb[0].mxu0
    %v354 = vadd.f32 0.0, %v353
    %v355 = vpop.f32.mrb[0].mxu0
    %356 = vdwg.mxu0
    %s357 = scalar_lea.vmem [#allocation5], 128
    %v358 = vld [vmem:[%s357] sm:$0xf]
    %v359 = vld [vmem:[%s357 + $0x4] sm:$0xf]
    %v360 = vld [vmem:[%s357 + $0x8] sm:$0xf]
    %v361 = vld [vmem:[%s357 + $0xc] sm:$0xf]
    %v362 = vld [vmem:[%s357 + $0x10] sm:$0xf]
    %v363 = vld [vmem:[%s357 + $0x14] sm:$0xf]
    %v364 = vld [vmem:[%s357 + $0x18] sm:$0xf]
    %v365 = vld [vmem:[%s357 + $0x1c] sm:$0xf]
    %v366 = vld [vmem:[%s357 + $0x20] sm:$0xf]
    %v367 = vld [vmem:[%s357 + $0x24] sm:$0xf]
    %v368 = vld [vmem:[%s357 + $0x28] sm:$0xf]
    %v369 = vld [vmem:[%s357 + $0x2c] sm:$0xf]
    %v370 = vld [vmem:[%s357 + $0x30] sm:$0xf]
    %v371 = vld [vmem:[%s357 + $0x34] sm:$0xf]
    %v372 = vld [vmem:[%s357 + $0x38] sm:$0xf]
    %v373 = vld [vmem:[%s357 + $0x3c] sm:$0xf]
    %v390 = vunpack.c.l.b16 %v358
    %v391 = vunpack.c.l.b16 %v359
    %v392 = vunpack.c.l.b16 %v360
    %v393 = vunpack.c.l.b16 %v361
    %v394 = vunpack.c.l.b16 %v362
    %v395 = vunpack.c.l.b16 %v363
    %v396 = vunpack.c.l.b16 %v364
    %v397 = vunpack.c.l.b16 %v365
    %v398 = vunpack.c.l.b16 %v366
    %v399 = vunpack.c.l.b16 %v367
    %v400 = vunpack.c.l.b16 %v368
    %v401 = vunpack.c.l.b16 %v369
    %v402 = vunpack.c.l.b16 %v370
    %v403 = vunpack.c.l.b16 %v371
    %v404 = vunpack.c.l.b16 %v372
    %v405 = vunpack.c.l.b16 %v373
    %v406 = vpack.c.b16 %v391, %v390
    %v407 = vpack.c.b16 %v393, %v392
    %v408 = vpack.c.b16 %v395, %v394
    %v409 = vpack.c.b16 %v397, %v396
    %v410 = vpack.c.b16 %v399, %v398
    %v411 = vpack.c.b16 %v401, %v400
    %v412 = vpack.c.b16 %v403, %v402
    %v413 = vpack.c.b16 %v405, %v404
    %422 = vmatprep.subr.bf16.mxu0 0
    %423 = vmatpush1.bf16.msra.mxu0 %v406
    %424 = vmatprep.subr.bf16.mxu0 0
    %425 = vmatpush1.bf16.msra.mxu0 %v407
    %426 = vmatprep.subr.bf16.mxu0 0
    %427 = vmatpush1.bf16.msra.mxu0 %v408
    %428 = vmatprep.subr.bf16.mxu0 0
    %429 = vmatpush1.bf16.msra.mxu0 %v409
    %430 = vmatprep.subr.bf16.mxu0 0
    %431 = vmatpush1.bf16.msra.mxu0 %v410
    %432 = vmatprep.subr.bf16.mxu0 0
    %433 = vmatpush1.bf16.msra.mxu0 %v411
    %434 = vmatprep.subr.bf16.mxu0 0
    %435 = vmatpush1.bf16.msra.mxu0 %v412
    %436 = vmatprep.subr.bf16.mxu0 0
    %437 = vmatpush1.bf16.msra.mxu0 %v413
    %438 = vmatprep.subr.bf16.mxu0 0
    %439 = vmatpush1.bf16.msra.mxu0 0
    %440 = vmatprep.subr.bf16.mxu0 0
    %441 = vmatpush1.bf16.msra.mxu0 0
    %442 = vmatprep.subr.bf16.mxu0 0
    %443 = vmatpush1.bf16.msra.mxu0 0
    %444 = vmatprep.subr.bf16.mxu0 0
    %445 = vmatpush1.bf16.msra.mxu0 0
    %446 = vmatprep.subr.bf16.mxu0 0
    %447 = vmatpush1.bf16.msra.mxu0 0
    %448 = vmatprep.subr.bf16.mxu0 0
    %449 = vmatpush1.bf16.msra.mxu0 0
    %450 = vmatprep.subr.bf16.mxu0 0
    %451 = vmatpush1.bf16.msra.mxu0 0
    %452 = vmatprep.subr.bf16.mxu0 0
    %453 = vmatpush1.bf16.msra.mxu0 0
    %454 = vmatprep.mubr.bf16.mxu0 0
    %455 = vmatmul.mubr.bf16.gmra.mrb[0].mxu0 %v67
    %v456 = vpop.f32.mrb[0].mxu0
    %v457 = vadd.f32 0.0, %v456
    %v458 = vpop.f32.mrb[0].mxu0
    %v459 = vpop.f32.mrb[0].mxu0
    %v460 = vadd.f32 0.0, %v459
    %v461 = vpop.f32.mrb[0].mxu0
    %462 = vmatprep.mubr.bf16.mxu0 0
    %463 = vmatmul.mubr.bf16.gmra.mrb[0].mxu0 %v68
    %v464 = vpop.f32.mrb[0].mxu0
    %v465 = vadd.f32 0.0, %v464
    %v466 = vpop.f32.mrb[0].mxu0
    %v467 = vpop.f32.mrb[0].mxu0
    %v468 = vadd.f32 0.0, %v467
    %v469 = vpop.f32.mrb[0].mxu0
    %470 = vdwg.mxu0
    %v471 = vrot.slane %v229, 7
    %v472 = vrot.slane %v232, 7
    %v473 = vrot.slane %v237, 7
    %v474 = vrot.slane %v240, 7
    %vm475 = vcmp.lt.s32.totalorder %v70, 1
    %v476 = vsel %vm475, %v473, %v474
    %v477 = vsel %vm475, %v472, %v473
    %v478 = vsel %vm475, %v471, %v472
    %v479 = vsel %vm475, %v474, %v471
    %v480 = vsel %vm122, 1, 0
    %v481 = vsel %vm123, 1, 0
    %v482 = vsel %vm124, 1, 0
    %v483 = vsel %vm125, 1, 0
    %vm484 = vcmp.eq.s32.totalorder %v480, 1
    %vm485 = vcmp.eq.s32.totalorder %v481, 1
    %vm486 = vcmp.eq.s32.totalorder %v482, 1
    %vm487 = vcmp.eq.s32.totalorder %v483, 1
    %v488 = vsel %vm484, %v479, 0.0
    %v489 = vsel %vm485, %v478, 0.0
    %v490 = vsel %vm486, %v477, 0.0
    %v491 = vsel %vm487, %v476, 0.0
    %v492 = vrot.slane %v457, 1
    %v493 = vrot.slane %v460, 1
    %v494 = vrot.slane %v465, 1
    %v495 = vrot.slane %v468, 1
    %vm496 = vcmp.lt.s32.totalorder %v70, 7
    %v497 = vsel %vm496, %v494, %v495
    %v498 = vsel %vm496, %v493, %v494
    %v499 = vsel %vm496, %v492, %v493
    %v500 = vsel %vm496, %v495, %v492
    %v501 = vsel %vm126, 1, 0
    %v502 = vsel %vm127, 1, 0
    %v503 = vsel %vm128, 1, 0
    %v504 = vsel %vm129, 1, 0
    %vm505 = vcmp.eq.s32.totalorder %v501, 1
    %vm506 = vcmp.eq.s32.totalorder %v502, 1
    %vm507 = vcmp.eq.s32.totalorder %v503, 1
    %vm508 = vcmp.eq.s32.totalorder %v504, 1
    %v509 = vsel %vm505, %v499, 0.0
    %v510 = vsel %vm506, %v498, 0.0
    %v511 = vsel %vm507, %v497, 0.0
    %v512 = vsel %vm508, %v500, 0.0
    %v513 = vadd.f32 %v488, %v343
    %v514 = vadd.f32 %v489, %v346
    %v515 = vadd.f32 %v490, %v351
    %v516 = vadd.f32 %v491, %v354
    %v517 = vadd.f32 %v513, %v509
    %v518 = vadd.f32 %v514, %v510
    %v519 = vadd.f32 %v515, %v511
    %v520 = vadd.f32 %v516, %v512
    %v521 = vld [vmem:[%s3] sm:$0x1]
    %v523 = vlaneseq
    %v524 = vshrl.u32 %v523, 7
    %v525 = vsub.s32 0, %v524
    %v526 = vrot.slane %v521, %v525
    %v528 = vadd.f32 %v517, %v526
    %v529 = vadd.f32 %v518, %v526
    %v530 = vadd.f32 %v519, %v526
    %v531 = vadd.f32 %v520, %v526
    %v532 = vmax.f32 %v528, 0.0
    %v533 = vmax.f32 %v529, 0.0
    %v534 = vmax.f32 %v530, 0.0
    %v535 = vmax.f32 %v531, 0.0
    %v536 = vpack.c.bf16 %v533, %v532
    %v537 = vpack.c.bf16 %v535, %v534
    %v538 = vld [vmem:[#allocation7] sm:$0xf]
    %v539 = vld [vmem:[#allocation7 + $0x4] sm:$0xf]
    %v540 = vld [vmem:[#allocation7 + $0x8] sm:$0xf]
    %v541 = vld [vmem:[#allocation7 + $0xc] sm:$0xf]
    %v542 = vld [vmem:[#allocation7 + $0x10] sm:$0xf]
    %v543 = vld [vmem:[#allocation7 + $0x14] sm:$0xf]
    %v544 = vld [vmem:[#allocation7 + $0x18] sm:$0xf]
    %v545 = vld [vmem:[#allocation7 + $0x1c] sm:$0xf]
    %v546 = vld [vmem:[#allocation7 + $0x20] sm:$0xf]
    %v547 = vld [vmem:[#allocation7 + $0x24] sm:$0xf]
    %v548 = vld [vmem:[#allocation7 + $0x28] sm:$0xf]
    %v549 = vld [vmem:[#allocation7 + $0x2c] sm:$0xf]
    %v550 = vld [vmem:[#allocation7 + $0x30] sm:$0xf]
    %v551 = vld [vmem:[#allocation7 + $0x34] sm:$0xf]
    %v552 = vld [vmem:[#allocation7 + $0x38] sm:$0xf]
    %v553 = vld [vmem:[#allocation7 + $0x3c] sm:$0xf]
    %v570 = vunpack.c.l.b16 %v538
    %v571 = vunpack.c.l.b16 %v539
    %v572 = vunpack.c.l.b16 %v540
    %v573 = vunpack.c.l.b16 %v541
    %v574 = vunpack.c.l.b16 %v542
    %v575 = vunpack.c.l.b16 %v543
    %v576 = vunpack.c.l.b16 %v544
    %v577 = vunpack.c.l.b16 %v545
    %v578 = vunpack.c.l.b16 %v546
    %v579 = vunpack.c.l.b16 %v547
    %v580 = vunpack.c.l.b16 %v548
    %v581 = vunpack.c.l.b16 %v549
    %v582 = vunpack.c.l.b16 %v550
    %v583 = vunpack.c.l.b16 %v551
    %v584 = vunpack.c.l.b16 %v552
    %v585 = vunpack.c.l.b16 %v553
    %v586 = vpack.c.b16 %v571, %v570
    %v587 = vpack.c.b16 %v573, %v572
    %v588 = vpack.c.b16 %v575, %v574
    %v589 = vpack.c.b16 %v577, %v576
    %v590 = vpack.c.b16 %v579, %v578
    %v591 = vpack.c.b16 %v581, %v580
    %v592 = vpack.c.b16 %v583, %v582
    %v593 = vpack.c.b16 %v585, %v584
    %602 = vmatprep.subr.bf16.mxu0 0
    %603 = vmatpush1.bf16.msra.mxu0 %v586
    %604 = vmatprep.subr.bf16.mxu0 0
    %605 = vmatpush1.bf16.msra.mxu0 %v587
    %606 = vmatprep.subr.bf16.mxu0 0
    %607 = vmatpush1.bf16.msra.mxu0 %v588
    %608 = vmatprep.subr.bf16.mxu0 0
    %609 = vmatpush1.bf16.msra.mxu0 %v589
    %610 = vmatprep.subr.bf16.mxu0 0
    %611 = vmatpush1.bf16.msra.mxu0 %v590
    %612 = vmatprep.subr.bf16.mxu0 0
    %613 = vmatpush1.bf16.msra.mxu0 %v591
    %614 = vmatprep.subr.bf16.mxu0 0
    %615 = vmatpush1.bf16.msra.mxu0 %v592
    %616 = vmatprep.subr.bf16.mxu0 0
    %617 = vmatpush1.bf16.msra.mxu0 %v593
    %618 = vmatprep.subr.bf16.mxu0 0
    %619 = vmatpush1.bf16.msra.mxu0 0
    %620 = vmatprep.subr.bf16.mxu0 0
    %621 = vmatpush1.bf16.msra.mxu0 0
    %622 = vmatprep.subr.bf16.mxu0 0
    %623 = vmatpush1.bf16.msra.mxu0 0
    %624 = vmatprep.subr.bf16.mxu0 0
    %625 = vmatpush1.bf16.msra.mxu0 0
    %626 = vmatprep.subr.bf16.mxu0 0
    %627 = vmatpush1.bf16.msra.mxu0 0
    %628 = vmatprep.subr.bf16.mxu0 0
    %629 = vmatpush1.bf16.msra.mxu0 0
    %630 = vmatprep.subr.bf16.mxu0 0
    %631 = vmatpush1.bf16.msra.mxu0 0
    %632 = vmatprep.subr.bf16.mxu0 0
    %633 = vmatpush1.bf16.msra.mxu0 0
    %634 = vmatprep.mubr.bf16.mxu0 0
    %635 = vmatmul.mubr.bf16.gmra.mrb[0].mxu0 %v536
    %v636 = vpop.f32.mrb[0].mxu0
    %v637 = vadd.f32 0.0, %v636
    %v638 = vpop.f32.mrb[0].mxu0
    %v639 = vpop.f32.mrb[0].mxu0
    %v640 = vadd.f32 0.0, %v639
    %v641 = vpop.f32.mrb[0].mxu0
    %642 = vmatprep.mubr.bf16.mxu0 0
    %643 = vmatmul.mubr.bf16.gmra.mrb[0].mxu0 %v537
    %v644 = vpop.f32.mrb[0].mxu0
    %v645 = vadd.f32 0.0, %v644
    %v646 = vpop.f32.mrb[0].mxu0
    %v647 = vpop.f32.mrb[0].mxu0
    %v648 = vadd.f32 0.0, %v647
    %v649 = vpop.f32.mrb[0].mxu0
    %650 = vdwg.mxu0
    %s651 = scalar_lea.vmem [#allocation7], 64
    %v652 = vld [vmem:[%s651] sm:$0xf]
    %v653 = vld [vmem:[%s651 + $0x4] sm:$0xf]
    %v654 = vld [vmem:[%s651 + $0x8] sm:$0xf]
    %v655 = vld [vmem:[%s651 + $0xc] sm:$0xf]
    %v656 = vld [vmem:[%s651 + $0x10] sm:$0xf]
    %v657 = vld [vmem:[%s651 + $0x14] sm:$0xf]
    %v658 = vld [vmem:[%s651 + $0x18] sm:$0xf]
    %v659 = vld [vmem:[%s651 + $0x1c] sm:$0xf]
    %v660 = vld [vmem:[%s651 + $0x20] sm:$0xf]
    %v661 = vld [vmem:[%s651 + $0x24] sm:$0xf]
    %v662 = vld [vmem:[%s651 + $0x28] sm:$0xf]
    %v663 = vld [vmem:[%s651 + $0x2c] sm:$0xf]
    %v664 = vld [vmem:[%s651 + $0x30] sm:$0xf]
    %v665 = vld [vmem:[%s651 + $0x34] sm:$0xf]
    %v666 = vld [vmem:[%s651 + $0x38] sm:$0xf]
    %v667 = vld [vmem:[%s651 + $0x3c] sm:$0xf]
    %v684 = vunpack.c.l.b16 %v652
    %v685 = vunpack.c.l.b16 %v653
    %v686 = vunpack.c.l.b16 %v654
    %v687 = vunpack.c.l.b16 %v655
    %v688 = vunpack.c.l.b16 %v656
    %v689 = vunpack.c.l.b16 %v657
    %v690 = vunpack.c.l.b16 %v658
    %v691 = vunpack.c.l.b16 %v659
    %v692 = vunpack.c.l.b16 %v660
    %v693 = vunpack.c.l.b16 %v661
    %v694 = vunpack.c.l.b16 %v662
    %v695 = vunpack.c.l.b16 %v663
    %v696 = vunpack.c.l.b16 %v664
    %v697 = vunpack.c.l.b16 %v665
    %v698 = vunpack.c.l.b16 %v666
    %v699 = vunpack.c.l.b16 %v667
    %v700 = vpack.c.b16 %v685, %v684
    %v701 = vpack.c.b16 %v687, %v686
    %v702 = vpack.c.b16 %v689, %v688
    %v703 = vpack.c.b16 %v691, %v690
    %v704 = vpack.c.b16 %v693, %v692
    %v705 = vpack.c.b16 %v695, %v694
    %v706 = vpack.c.b16 %v697, %v696
    %v707 = vpack.c.b16 %v699, %v698
    %716 = vmatprep.subr.bf16.mxu0 0
    %717 = vmatpush1.bf16.msra.mxu0 %v700
    %718 = vmatprep.subr.bf16.mxu0 0
    %719 = vmatpush1.bf16.msra.mxu0 %v701
    %720 = vmatprep.subr.bf16.mxu0 0
    %721 = vmatpush1.bf16.msra.mxu0 %v702
    %722 = vmatprep.subr.bf16.mxu0 0
    %723 = vmatpush1.bf16.msra.mxu0 %v703
    %724 = vmatprep.subr.bf16.mxu0 0
    %725 = vmatpush1.bf16.msra.mxu0 %v704
    %726 = vmatprep.subr.bf16.mxu0 0
    %727 = vmatpush1.bf16.msra.mxu0 %v705
    %728 = vmatprep.subr.bf16.mxu0 0
    %729 = vmatpush1.bf16.msra.mxu0 %v706
    %730 = vmatprep.subr.bf16.mxu0 0
    %731 = vmatpush1.bf16.msra.mxu0 %v707
    %732 = vmatprep.subr.bf16.mxu0 0
    %733 = vmatpush1.bf16.msra.mxu0 0
    %734 = vmatprep.subr.bf16.mxu0 0
    %735 = vmatpush1.bf16.msra.mxu0 0
    %736 = vmatprep.subr.bf16.mxu0 0
    %737 = vmatpush1.bf16.msra.mxu0 0
    %738 = vmatprep.subr.bf16.mxu0 0
    %739 = vmatpush1.bf16.msra.mxu0 0
    %740 = vmatprep.subr.bf16.mxu0 0
    %741 = vmatpush1.bf16.msra.mxu0 0
    %742 = vmatprep.subr.bf16.mxu0 0
    %743 = vmatpush1.bf16.msra.mxu0 0
    %744 = vmatprep.subr.bf16.mxu0 0
    %745 = vmatpush1.bf16.msra.mxu0 0
    %746 = vmatprep.subr.bf16.mxu0 0
    %747 = vmatpush1.bf16.msra.mxu0 0
    %748 = vmatprep.mubr.bf16.mxu0 0
    %749 = vmatmul.mubr.bf16.gmra.mrb[0].mxu0 %v536
    %v750 = vpop.f32.mrb[0].mxu0
    %v751 = vadd.f32 0.0, %v750
    %v752 = vpop.f32.mrb[0].mxu0
    %v753 = vpop.f32.mrb[0].mxu0
    %v754 = vadd.f32 0.0, %v753
    %v755 = vpop.f32.mrb[0].mxu0
    %756 = vmatprep.mubr.bf16.mxu0 0
    %757 = vmatmul.mubr.bf16.gmra.mrb[0].mxu0 %v537
    %v758 = vpop.f32.mrb[0].mxu0
    %v759 = vadd.f32 0.0, %v758
    %v760 = vpop.f32.mrb[0].mxu0
    %v761 = vpop.f32.mrb[0].mxu0
    %v762 = vadd.f32 0.0, %v761
    %v763 = vpop.f32.mrb[0].mxu0
    %764 = vdwg.mxu0
    %s765 = scalar_lea.vmem [#allocation7], 128
    %v766 = vld [vmem:[%s765] sm:$0xf]
    %v767 = vld [vmem:[%s765 + $0x4] sm:$0xf]
    %v768 = vld [vmem:[%s765 + $0x8] sm:$0xf]
    %v769 = vld [vmem:[%s765 + $0xc] sm:$0xf]
    %v770 = vld [vmem:[%s765 + $0x10] sm:$0xf]
    %v771 = vld [vmem:[%s765 + $0x14] sm:$0xf]
    %v772 = vld [vmem:[%s765 + $0x18] sm:$0xf]
    %v773 = vld [vmem:[%s765 + $0x1c] sm:$0xf]
    %v774 = vld [vmem:[%s765 + $0x20] sm:$0xf]
    %v775 = vld [vmem:[%s765 + $0x24] sm:$0xf]
    %v776 = vld [vmem:[%s765 + $0x28] sm:$0xf]
    %v777 = vld [vmem:[%s765 + $0x2c] sm:$0xf]
    %v778 = vld [vmem:[%s765 + $0x30] sm:$0xf]
    %v779 = vld [vmem:[%s765 + $0x34] sm:$0xf]
    %v780 = vld [vmem:[%s765 + $0x38] sm:$0xf]
    %v781 = vld [vmem:[%s765 + $0x3c] sm:$0xf]
    %v798 = vunpack.c.l.b16 %v766
    %v799 = vunpack.c.l.b16 %v767
    %v800 = vunpack.c.l.b16 %v768
    %v801 = vunpack.c.l.b16 %v769
    %v802 = vunpack.c.l.b16 %v770
    %v803 = vunpack.c.l.b16 %v771
    %v804 = vunpack.c.l.b16 %v772
    %v805 = vunpack.c.l.b16 %v773
    %v806 = vunpack.c.l.b16 %v774
    %v807 = vunpack.c.l.b16 %v775
    %v808 = vunpack.c.l.b16 %v776
    %v809 = vunpack.c.l.b16 %v777
    %v810 = vunpack.c.l.b16 %v778
    %v811 = vunpack.c.l.b16 %v779
    %v812 = vunpack.c.l.b16 %v780
    %v813 = vunpack.c.l.b16 %v781
    %v814 = vpack.c.b16 %v799, %v798
    %v815 = vpack.c.b16 %v801, %v800
    %v816 = vpack.c.b16 %v803, %v802
    %v817 = vpack.c.b16 %v805, %v804
    %v818 = vpack.c.b16 %v807, %v806
    %v819 = vpack.c.b16 %v809, %v808
    %v820 = vpack.c.b16 %v811, %v810
    %v821 = vpack.c.b16 %v813, %v812
    %830 = vmatprep.subr.bf16.mxu0 0
    %831 = vmatpush1.bf16.msra.mxu0 %v814
    %832 = vmatprep.subr.bf16.mxu0 0
    %833 = vmatpush1.bf16.msra.mxu0 %v815
    %834 = vmatprep.subr.bf16.mxu0 0
    %835 = vmatpush1.bf16.msra.mxu0 %v816
    %836 = vmatprep.subr.bf16.mxu0 0
    %837 = vmatpush1.bf16.msra.mxu0 %v817
    %838 = vmatprep.subr.bf16.mxu0 0
    %839 = vmatpush1.bf16.msra.mxu0 %v818
    %840 = vmatprep.subr.bf16.mxu0 0
    %841 = vmatpush1.bf16.msra.mxu0 %v819
    %842 = vmatprep.subr.bf16.mxu0 0
    %843 = vmatpush1.bf16.msra.mxu0 %v820
    %844 = vmatprep.subr.bf16.mxu0 0
    %845 = vmatpush1.bf16.msra.mxu0 %v821
    %846 = vmatprep.subr.bf16.mxu0 0
    %847 = vmatpush1.bf16.msra.mxu0 0
    %848 = vmatprep.subr.bf16.mxu0 0
    %849 = vmatpush1.bf16.msra.mxu0 0
    %850 = vmatprep.subr.bf16.mxu0 0
    %851 = vmatpush1.bf16.msra.mxu0 0
    %852 = vmatprep.subr.bf16.mxu0 0
    %853 = vmatpush1.bf16.msra.mxu0 0
    %854 = vmatprep.subr.bf16.mxu0 0
    %855 = vmatpush1.bf16.msra.mxu0 0
    %856 = vmatprep.subr.bf16.mxu0 0
    %857 = vmatpush1.bf16.msra.mxu0 0
    %858 = vmatprep.subr.bf16.mxu0 0
    %859 = vmatpush1.bf16.msra.mxu0 0
    %860 = vmatprep.subr.bf16.mxu0 0
    %861 = vmatpush1.bf16.msra.mxu0 0
    %862 = vmatprep.mubr.bf16.mxu0 0
    %863 = vmatmul.mubr.bf16.gmra.mrb[0].mxu0 %v536
    %v864 = vpop.f32.mrb[0].mxu0
    %v865 = vadd.f32 0.0, %v864
    %v866 = vpop.f32.mrb[0].mxu0
    %v867 = vpop.f32.mrb[0].mxu0
    %v868 = vadd.f32 0.0, %v867
    %v869 = vpop.f32.mrb[0].mxu0
    %870 = vmatprep.mubr.bf16.mxu0 0
    %871 = vmatmul.mubr.bf16.gmra.mrb[0].mxu0 %v537
    %v872 = vpop.f32.mrb[0].mxu0
    %v873 = vadd.f32 0.0, %v872
    %v874 = vpop.f32.mrb[0].mxu0
    %v875 = vpop.f32.mrb[0].mxu0
    %v876 = vadd.f32 0.0, %v875
    %v877 = vpop.f32.mrb[0].mxu0
    %878 = vdwg.mxu0
    %v879 = vrot.slane %v637, 7
    %v880 = vrot.slane %v640, 7
    %v881 = vrot.slane %v645, 7
    %v882 = vrot.slane %v648, 7
    %v883 = vsel %vm475, %v881, %v882
    %v884 = vsel %vm475, %v880, %v881
    %v885 = vsel %vm475, %v879, %v880
    %v886 = vsel %vm475, %v882, %v879
    %v887 = vsel %vm484, %v886, 0.0
    %v888 = vsel %vm485, %v885, 0.0
    %v889 = vsel %vm486, %v884, 0.0
    %v890 = vsel %vm487, %v883, 0.0
    %v891 = vrot.slane %v865, 1
    %v892 = vrot.slane %v868, 1
    %v893 = vrot.slane %v873, 1
    %v894 = vrot.slane %v876, 1
    %v895 = vsel %vm496, %v893, %v894
    %v896 = vsel %vm496, %v892, %v893
    %v897 = vsel %vm496, %v891, %v892
    %v898 = vsel %vm496, %v894, %v891
    %v899 = vsel %vm505, %v897, 0.0
    %v900 = vsel %vm506, %v896, 0.0
    %v901 = vsel %vm507, %v895, 0.0
    %v902 = vsel %vm508, %v898, 0.0
    %v903 = vadd.f32 %v887, %v751
    %v904 = vadd.f32 %v888, %v754
    %v905 = vadd.f32 %v889, %v759
    %v906 = vadd.f32 %v890, %v762
    %v907 = vadd.f32 %v903, %v899
    %v908 = vadd.f32 %v904, %v900
    %v909 = vadd.f32 %v905, %v901
    %v910 = vadd.f32 %v906, %v902
    %v911 = vld [vmem:[%s4] sm:$0x1]
    %v913 = vlaneseq
    %v914 = vshrl.u32 %v913, 7
    %v915 = vsub.s32 0, %v914
    %v916 = vrot.slane %v911, %v915
    %v918 = vadd.f32 %v907, %v916
    %v919 = vadd.f32 %v908, %v916
    %v920 = vadd.f32 %v909, %v916
    %v921 = vadd.f32 %v910, %v916
    %v922 = vadd.f32 %v918, %v63
    %v923 = vadd.f32 %v919, %v64
    %v924 = vadd.f32 %v920, %v65
    %v925 = vadd.f32 %v921, %v66
    %v926 = vmax.f32 %v922, 0.0
    %v927 = vmax.f32 %v923, 0.0
    %v928 = vmax.f32 %v924, 0.0
    %v929 = vmax.f32 %v925, 0.0
    %930 = vst [vmem:[#allocation8] sm:$0xff] %v926
    %931 = vst [vmem:[#allocation8 + $0x8] sm:$0xff] %v927
    %932 = vst [vmem:[#allocation8 + $0x10] sm:$0xff] %v928
    %933 = vst [vmem:[#allocation8 + $0x18] sm:$0xff] %v929
    // Predicated region
    $region34: #{tpu_custom_call.1} parent=1 // pred_check
      _
    $region35: #{tpu_custom_call.1} parent=1 // pred_check_branch
      %935 = sbr.rel (0) target = $region37
    $region36: #{tpu_custom_call.1} parent=1 // pred_region
      %s937 = ssub.s32 512, 512
      %938 = vsyncadd [#allocation4], %s937
      %s939 = sshll.u32 [#allocation8], 4
      %s940 = int_to_ptr.vmem [resolvable:$true] %s939
      %945 = dma.vmem_to_hbm [thread:$0]  %s940, 512, %s5, [#allocation4], 128, 128, 8
    $region37: #{tpu_custom_call.1} parent=1 // pred_fallthru
      _
    // Predicated region
    $region38: #{tpu_custom_call.1} parent=1 // pred_check
      _
    $region39: #{tpu_custom_call.1} parent=1 // pred_check_branch
      %947 = sbr.rel (0) target = $region41
    $region40: #{tpu_custom_call.1} parent=1 // pred_region
      %948 = dma.done [#allocation4], 512
    $region41: #{tpu_custom_call.1} parent=1 // pred_fallthru
      _
    %949 = vsyncpa [#allocation3], 1
    %950 = vsyncpa [#allocation6], 1
    %951 = vsyncpa [#allocation4], 1

</llo_original>
